<compile_context>
chip_gen: v7x
topology: tpu7x:2x2x1
jax: 0.10.0
libtpu: 0.0.40
codegen_flags: <defaults>
</compile_context>

<pallas_src>
import jax
import jax.numpy as jnp
from jax.experimental import pallas as pl
from jax.experimental.pallas import tpu as pltpu

PATCH = 8
CIN = 3
K = CIN * PATCH * PATCH  # 192


def _round_up(x, m):
    return ((x + m - 1) // m) * m


def _patch_embed_kernel(x_ref, w_ref, b_ref, o_ref):
    # x_ref: [tm, K]      patch-row tile (compute dtype)
    # w_ref: [K, E_pad]   VMEM-resident weight (compute dtype)
    # b_ref: [1, E_pad]   VMEM-resident bias (f32)
    # o_ref: [tm, E_pad]
    acc = jnp.dot(x_ref[...], w_ref[...], preferred_element_type=jnp.float32)
    o_ref[...] = (acc + b_ref[...]).astype(o_ref.dtype)


def _largest_dividing_tile(m, cap, align):
    """Largest multiple of `align` <= cap that divides m, or None."""
    t = (cap // align) * align
    while t >= align:
        if m % t == 0:
            return t
        t -= align
    return None


def _vmem_capacity_bytes():
    try:
        return int(getattr(pltpu.get_tpu_info(), "vmem_capacity_bytes", 64 << 20))
    except Exception:
        return 64 << 20


def patch_embed_pallas(x, weight, bias, *, compute_dtype=None, out_dtype=None):
    """
    x:      [B, 3, H, W]   (NCHW, H % 8 == 0, W % 8 == 0)
    weight: [E, 3, 8, 8]   (PyTorch Conv2d weight layout)
    bias:   [E]
    returns [B, (H//8)*(W//8), E] == rearrange(conv(x), 'b c h w -> b (h w) c')

    compute_dtype: matmul input dtype (e.g. jnp.bfloat16 on the HBM-bound path);
                   accumulation is always f32.
    out_dtype:     output dtype (defaults to x.dtype; bf16 halves the dominant
                   output-write traffic when downstream accepts it).
    """
    B, C, H, W = x.shape
    assert C == CIN and H % PATCH == 0 and W % PATCH == 0
    E = weight.shape[0]
    Hp, Wp = H // PATCH, W // PATCH
    P = Hp * Wp
    M = B * P

    if compute_dtype is None:
        compute_dtype = x.dtype
    if out_dtype is None:
        out_dtype = x.dtype
    bytes_in = jnp.dtype(compute_dtype).itemsize
    bytes_out = jnp.dtype(out_dtype).itemsize

    # --- cast BEFORE the im2col transpose (materialize patches at compute precision) ---
    x_c = x.astype(compute_dtype)
    w_c = weight.astype(compute_dtype)

    # --- im2col glue: [B,3,Hp,8,Wp,8] -> [B,Hp,Wp,3,8,8] -> [M, K] (cin,kh,kw order) ---
    patches = x_c.reshape(B, CIN, Hp, PATCH, Wp, PATCH)
    patches = patches.transpose(0, 2, 4, 1, 3, 5).reshape(M, K)
    w_mat = w_c.reshape(E, K).T                       # [K, E], matches patch flatten order
    b_mat = bias.reshape(1, E).astype(jnp.float32)    # bias stays f32

    # Lane-dense output columns: pad only the tiny weight/bias along E to a 128 multiple.
    E_pad = _round_up(E, 128)
    if E_pad != E:
        w_mat = jnp.pad(w_mat, ((0, 0), (0, E_pad - E)))
        b_mat = jnp.pad(b_mat, ((0, 0), (0, E_pad - E)))

    # --- row-tile sizing from VMEM budget (weight is resident; in/out double-buffered) ---
    align = 16 if jnp.dtype(compute_dtype) == jnp.dtype(jnp.bfloat16) else 8
    vmem_cap = _vmem_capacity_bytes()
    budget = min(vmem_cap // 2, 48 << 20)               # headroom for weight + scratch
    per_row = 2 * (K * bytes_in + E_pad * bytes_out)    # double-buffered input + output
    tm_cap = (budget // per_row) // align * align
    tm_cap = max(align, min(tm_cap, 4096))

    if M <= tm_cap:
        if M >= 2048 and (M // 2) % align == 0:
            tm = M // 2          # two balanced tiles -> keep both v7x TCs busy
        else:
            tm = M               # single full-extent block (no (8,128) constraint issues)
    else:
        tm = _largest_dividing_tile(M, tm_cap, align) or tm_cap  # else ragged last block

    grid = (pl.cdiv(M, tm),)

    vmem_limit = int(max(32 << 20, min(vmem_cap * 3 // 4, 64 << 20)))

    cost = pl.CostEstimate(
        flops=2 * M * K * E_pad,
        transcendentals=0,
        bytes_accessed=(M * K * bytes_in            # patches, streamed once
                        + K * E_pad * bytes_in      # weight, fetched once (resident)
                        + E_pad * 4                 # bias
                        + M * E_pad * bytes_out),   # output
    )

    out = pl.pallas_call(
        _patch_embed_kernel,
        out_shape=jax.ShapeDtypeStruct((M, E_pad), out_dtype),
        grid=grid,
        in_specs=[
            pl.BlockSpec((tm, K), lambda i: (i, 0)),       # patches: row tile, full K
            pl.BlockSpec((K, E_pad), lambda i: (0, 0)),    # weight: constant block -> resident
            pl.BlockSpec((1, E_pad), lambda i: (0, 0)),    # bias:   constant block -> resident
        ],
        out_specs=pl.BlockSpec((tm, E_pad), lambda i: (i, 0)),
        compiler_params=pltpu.CompilerParams(
            dimension_semantics=("parallel",),
            vmem_limit_bytes=vmem_limit,
        ),
        cost_estimate=cost,
    )(patches, w_mat, b_mat)

    if E_pad != E:
        out = out[:, :E]
    return out.reshape(B, P, E)


def reference(x, weight, bias):
    # Pure-JAX reference: conv2d stride=8 kernel=8, then 'b c h w -> b (h w) c'
    y = jax.lax.conv_general_dilated(
        x, weight, window_strides=(PATCH, PATCH), padding="VALID",
        dimension_numbers=("NCHW", "OIHW", "NCHW"))
    y = y + bias.reshape(1, -1, 1, 1)
    B, E, Hp, Wp = y.shape
    return y.transpose(0, 2, 3, 1).reshape(B, Hp * Wp, E)


if __name__ == "__main__":
    key = jax.random.PRNGKey(0)
    k_x, k_w, k_b = jax.random.split(key, 3)

    B, H, W = 2, 16, 16          # small spatial; the module's num_patch=144 is unused in forward
    embed_dim = 32

    x = jax.random.normal(k_x, (B, CIN, H, W), dtype=jnp.float32)
    # Deterministic synthetic params (Conv2d(3, embed_dim, 8, stride=8) shapes).
    weight = 0.02 * jax.random.normal(k_w, (embed_dim, CIN, PATCH, PATCH), dtype=jnp.float32)
    bias = 0.01 * jax.random.normal(k_b, (embed_dim,), dtype=jnp.float32)

    ref = reference(x, weight, bias)

    # f32 path (strict check)
    out = jax.block_until_ready(patch_embed_pallas(x, weight, bias))
    assert out.shape == (B, (H // PATCH) * (W // PATCH), embed_dim)
    assert jnp.allclose(out, ref, atol=1e-4, rtol=1e-4)

    # bf16 compute + bf16 output (mem-bound path; f32 accumulation) — loose tolerance
    out_bf16 = jax.block_until_ready(
        patch_embed_pallas(x, weight, bias,
                           compute_dtype=jnp.bfloat16, out_dtype=jnp.bfloat16))
    assert out_bf16.shape == out.shape and out_bf16.dtype == jnp.bfloat16
    assert jnp.allclose(out_bf16.astype(jnp.float32), ref, atol=3e-2, rtol=3e-2)

    print("KERNEL_OK")
</pallas_src>

<mosaic_0001>
module attributes {stable_mosaic.version = 11 : i64} {
  func.func @_patch_embed_kernel(%arg0: i32, %arg1: memref<8x192xf32, #tpu.memory_space<vmem>>, %arg2: memref<192x128xf32, #tpu.memory_space<vmem>>, %arg3: memref<1x128xf32, #tpu.memory_space<vmem>>, %arg4: memref<8x128xf32, #tpu.memory_space<vmem>>) attributes {dimension_semantics = [#tpu.dimension_semantics<parallel>], iteration_bounds = array<i64: 1>, scalar_prefetch = 0 : i64, scratch_operands = 0 : i64, tpu.core_type = #tpu.core_type<tc>, window_params = [{transform_indices = @transform_0, window_bounds = array<i64: 8, 192>}, {pipeline_mode = #tpu.pipeline_mode<synchronous>, transform_indices = @transform_1, window_bounds = array<i64: 192, 128>}, {pipeline_mode = #tpu.pipeline_mode<synchronous>, transform_indices = @transform_2, window_bounds = array<i64: 1, 128>}, {transform_indices = @transform_3, window_bounds = array<i64: 8, 128>}]} {
    %c0 = arith.constant 0 : index
    %c0_0 = arith.constant 0 : index
    %0 = vector.load %arg1[%c0, %c0_0] : memref<8x192xf32, #tpu.memory_space<vmem>>, vector<8x192xf32>
    %c0_1 = arith.constant 0 : index
    %c0_2 = arith.constant 0 : index
    %1 = vector.load %arg2[%c0_1, %c0_2] : memref<192x128xf32, #tpu.memory_space<vmem>>, vector<192x128xf32>
    %cst = arith.constant dense<0.000000e+00> : vector<8x128xf32>
    %2 = tpu.matmul %0, %1, %cst {dimension_numbers = #tpu.dot_dimension_numbers<[1], [0], [0], [1], [0, 0, 1, 1], [], []>} : vector<8x192xf32>, vector<192x128xf32>, vector<8x128xf32> -> vector<8x128xf32>
    %c0_3 = arith.constant 0 : index
    %c0_4 = arith.constant 0 : index
    %3 = vector.load %arg3[%c0_3, %c0_4] : memref<1x128xf32, #tpu.memory_space<vmem>>, vector<1x128xf32>
    %4 = vector.broadcast %3 : vector<1x128xf32> to vector<8x128xf32>
    %5 = arith.addf %2, %4 : vector<8x128xf32>
    %c0_5 = arith.constant 0 : index
    %c0_6 = arith.constant 0 : index
    %6 = vector.load %arg4[%c0_5, %c0_6] : memref<8x128xf32, #tpu.memory_space<vmem>>, vector<8x128xf32>
    tpu.vector_store %arg4[%c0_5, %c0_6], %5 {strides = array<i32>} : memref<8x128xf32, #tpu.memory_space<vmem>>, vector<8x128xf32>,
    return
  }
  func.func @transform_0(%arg0: i32) -> (i32, i32) {
    %c0_i32 = arith.constant 0 : i32
    %c0_i32_0 = arith.constant 0 : i32
    return %arg0, %c0_i32 : i32, i32
  }
  func.func @transform_1(%arg0: i32) -> (i32, i32) {
    %c0_i32 = arith.constant 0 : i32
    %c0_i32_0 = arith.constant 0 : i32
    %c0_i32_1 = arith.constant 0 : i32
    return %c0_i32, %c0_i32_0 : i32, i32
  }
  func.func @transform_2(%arg0: i32) -> (i32, i32) {
    %c0_i32 = arith.constant 0 : i32
    %c0_i32_0 = arith.constant 0 : i32
    %c0_i32_1 = arith.constant 0 : i32
    return %c0_i32, %c0_i32_0 : i32, i32
  }
  func.func @transform_3(%arg0: i32) -> (i32, i32) {
    %c0_i32 = arith.constant 0 : i32
    %c0_i32_0 = arith.constant 0 : i32
    return %arg0, %c0_i32 : i32, i32
  }
}

</mosaic_0001>

<llo_original>
// kernel: tpu_custom_call.1
$region0: #{tpu_custom_call.1}
  #allocation0 [shape = 'u32[]', space=smem, size = 0x4, offset = 0x4, fixed_abs, tag = 'smem constant byte address 0x4 - core index']
  #allocation1 [shape = 'u32[144,128]{1,0:T(1,128)}', space=vmem, size = 0x12000, scoped, tag = 'internal scratch']
  %s0 = inlined_call_operand.hbm [shape: f32[8,192], index: 0, kind: input, shape index: {}]
  %s1 = inlined_call_operand.hbm [shape: f32[192,128], index: 1, kind: input, shape index: {}]
  %s2 = inlined_call_operand.vmem [shape: f32[1,128], index: 2, kind: input, shape index: {}]
  %s3 = inlined_call_operand.hbm [shape: f32[8,128], index: 3, kind: output, shape index: {}]
  %s4 = sld [smem:[#allocation0]]
  $region30: #{tpu_custom_call.1} parent=0
    _
  %s6 = ssub.s32 1, %s4
  %s7 = scalar_select 0, %s6, %s4
  $region1: #{tpu_custom_call.1} parent=0
    #allocation2 [shape = 'u8[8192]{0}', space=vmem, size = 0x2000, scoped, tag = 'input window, operand 0, single buffered']
    #allocation3 [shape = 's32[1]{0}', space=sflag, size = 0x4, scoped, tag = 'scoped memory for tpu_custom_call.1']
    #allocation4 [shape = 's32[1]{0}', space=sflag, size = 0x4, scoped, tag = 'scoped memory for tpu_custom_call.1']
    #allocation5 [shape = 'u8[98304]{0}', space=vmem, size = 0x18000, scoped, tag = 'input window, operand 1, single buffered']
    #allocation6 [shape = 's32[1]{0}', space=sflag, size = 0x4, scoped, tag = 'scoped memory for tpu_custom_call.1']
    #allocation7 [shape = 'u8[4096]{0}', space=vmem, size = 0x1000, scoped, tag = 'output window, operand 0, single buffered']
    %8 = vsyncpa [#allocation3], 0
    %9 = vsyncpa [#allocation6], 0
    %10 = vsyncpa [#allocation4], 0
    // Predicated region
    $region2: #{tpu_custom_call.1} parent=1 // pred_check
      _
    $region3: #{tpu_custom_call.1} parent=1 // pred_check_branch
      %12 = sbr.rel (0) target = $region5
    $region4: #{tpu_custom_call.1} parent=1 // pred_region
      %s14 = ssub.s32 256, 256
      %15 = vsyncadd [#allocation3], %s14
      %s17 = sshll.u32 [#allocation2], 4
      %s18 = int_to_ptr.vmem [resolvable:$true] %s17
      %20 = dma.hbm_to_vmem [thread:$0]  %s0, 256, %s18, [#allocation3]
    $region5: #{tpu_custom_call.1} parent=1 // pred_fallthru
      _
    // Predicated region
    $region6: #{tpu_custom_call.1} parent=1 // pred_check
      _
    $region7: #{tpu_custom_call.1} parent=1 // pred_check_branch
      %22 = sbr.rel (0) target = $region9
    $region8: #{tpu_custom_call.1} parent=1 // pred_region
      %s24 = ssub.s32 3072, 3072
      %25 = vsyncadd [#allocation6], %s24
      %s26 = sshll.u32 [#allocation5], 4
      %s27 = int_to_ptr.vmem [resolvable:$true] %s26
      %32 = dma.hbm_to_vmem [thread:$0]  %s1, 3072, %s27, [#allocation6], 128, 128, 8
    $region9: #{tpu_custom_call.1} parent=1 // pred_fallthru
      _
    // Predicated region
    $region10: #{tpu_custom_call.1} parent=1 // pred_check
      _
    $region11: #{tpu_custom_call.1} parent=1 // pred_check_branch
      %34 = sbr.rel (0) target = $region13
    $region12: #{tpu_custom_call.1} parent=1 // pred_region
      _
    $region13: #{tpu_custom_call.1} parent=1 // pred_fallthru
      _
    // Predicated region
    $region14: #{tpu_custom_call.1} parent=1 // pred_check
      _
    $region15: #{tpu_custom_call.1} parent=1 // pred_check_branch
      %36 = sbr.rel (0) target = $region17
    $region16: #{tpu_custom_call.1} parent=1 // pred_region
      %37 = dma.done [#allocation3], 256
    $region17: #{tpu_custom_call.1} parent=1 // pred_fallthru
      _
    // Predicated region
    $region18: #{tpu_custom_call.1} parent=1 // pred_check
      _
    $region19: #{tpu_custom_call.1} parent=1 // pred_check_branch
      %39 = sbr.rel (0) target = $region21
    $region20: #{tpu_custom_call.1} parent=1 // pred_region
      %40 = dma.done [#allocation6], 3072
    $region21: #{tpu_custom_call.1} parent=1 // pred_fallthru
      _
    %v41 = vld [vmem:[#allocation2] sm:$0xff]
    %v42 = vld [vmem:[#allocation2 + $0x8] sm:$0xff]
    %v43 = vld [vmem:[#allocation5] sm:$0xff]
    %v44 = vld [vmem:[#allocation5 + $0x8] sm:$0xff]
    %v45 = vld [vmem:[#allocation5 + $0x10] sm:$0xff]
    %v46 = vld [vmem:[#allocation5 + $0x18] sm:$0xff]
    %v47 = vld [vmem:[#allocation5 + $0x20] sm:$0xff]
    %v48 = vld [vmem:[#allocation5 + $0x28] sm:$0xff]
    %v49 = vld [vmem:[#allocation5 + $0x30] sm:$0xff]
    %v50 = vld [vmem:[#allocation5 + $0x38] sm:$0xff]
    %v51 = vld [vmem:[#allocation5 + $0x40] sm:$0xff]
    %v52 = vld [vmem:[#allocation5 + $0x48] sm:$0xff]
    %v53 = vld [vmem:[#allocation5 + $0x50] sm:$0xff]
    %v54 = vld [vmem:[#allocation5 + $0x58] sm:$0xff]
    %v55 = vld [vmem:[#allocation5 + $0x60] sm:$0xff]
    %v56 = vld [vmem:[#allocation5 + $0x68] sm:$0xff]
    %v57 = vld [vmem:[#allocation5 + $0x70] sm:$0xff]
    %v58 = vld [vmem:[#allocation5 + $0x78] sm:$0xff]
    %v59 = vld [vmem:[#allocation5 + $0x80] sm:$0xff]
    %v60 = vld [vmem:[#allocation5 + $0x88] sm:$0xff]
    %v61 = vld [vmem:[#allocation5 + $0x90] sm:$0xff]
    %v62 = vld [vmem:[#allocation5 + $0x98] sm:$0xff]
    %v63 = vld [vmem:[#allocation5 + $0xa0] sm:$0xff]
    %v64 = vld [vmem:[#allocation5 + $0xa8] sm:$0xff]
    %v65 = vld [vmem:[#allocation5 + $0xb0] sm:$0xff]
    %v66 = vld [vmem:[#allocation5 + $0xb8] sm:$0xff]
    %v67 = vld [vmem:[%s2] sm:$0x1]
    %v69 = vlaneseq
    %v70 = vshrl.u32 %v69, 7
    %v71 = vsub.s32 0, %v70
    %v72 = vrot.slane %v67, %v71
    %vm74 = vcmask 523264
    %v76 = vsel %vm74, %v42, 0
    %78 = vmatprep.subr.mxu0 0.0
    %79 = vmatpush1.msra.mxu0 %v43
    %80 = vmatprep.subr.mxu0 0.0
    %81 = vmatpush1.msra.mxu0 %v44
    %82 = vmatprep.subr.mxu0 0.0
    %83 = vmatpush1.msra.mxu0 %v45
    %84 = vmatprep.subr.mxu0 0.0
    %85 = vmatpush1.msra.mxu0 %v46
    %86 = vmatprep.subr.mxu0 0.0
    %87 = vmatpush1.msra.mxu0 %v47
    %88 = vmatprep.subr.mxu0 0.0
    %89 = vmatpush1.msra.mxu0 %v48
    %90 = vmatprep.subr.mxu0 0.0
    %91 = vmatpush1.msra.mxu0 %v49
    %92 = vmatprep.subr.mxu0 0.0
    %93 = vmatpush1.msra.mxu0 %v50
    %94 = vmatprep.subr.mxu0 0.0
    %95 = vmatpush1.msra.mxu0 %v51
    %96 = vmatprep.subr.mxu0 0.0
    %97 = vmatpush1.msra.mxu0 %v52
    %98 = vmatprep.subr.mxu0 0.0
    %99 = vmatpush1.msra.mxu0 %v53
    %100 = vmatprep.subr.mxu0 0.0
    %101 = vmatpush1.msra.mxu0 %v54
    %102 = vmatprep.subr.mxu0 0.0
    %103 = vmatpush1.msra.mxu0 %v55
    %104 = vmatprep.subr.mxu0 0.0
    %105 = vmatpush1.msra.mxu0 %v56
    %106 = vmatprep.subr.mxu0 0.0
    %107 = vmatpush1.msra.mxu0 %v57
    %108 = vmatprep.subr.mxu0 0.0
    %109 = vmatpush1.msra.mxu0 %v58
    %110 = vmatprep.subr.mxu0 0.0
    %111 = vmatpush1.msra.mxu0 %v59
    %112 = vmatprep.subr.mxu0 0.0
    %113 = vmatpush1.msra.mxu0 %v60
    %114 = vmatprep.subr.mxu0 0.0
    %115 = vmatpush1.msra.mxu0 %v61
    %116 = vmatprep.subr.mxu0 0.0
    %117 = vmatpush1.msra.mxu0 %v62
    %118 = vmatprep.subr.mxu0 0.0
    %119 = vmatpush1.msra.mxu0 %v63
    %120 = vmatprep.subr.mxu0 0.0
    %121 = vmatpush1.msra.mxu0 %v64
    %122 = vmatprep.subr.mxu0 0.0
    %123 = vmatpush1.msra.mxu0 %v65
    %124 = vmatprep.subr.mxu0 0.0
    %125 = vmatpush1.msra.mxu0 %v66
    %126 = vmatprep.subr.mxu0 0.0
    %127 = vmatpush1.msra.mxu0 0.0
    %128 = vmatprep.subr.mxu0 0.0
    %129 = vmatpush1.msra.mxu0 0.0
    %130 = vmatprep.subr.mxu0 0.0
    %131 = vmatpush1.msra.mxu0 0.0
    %132 = vmatprep.subr.mxu0 0.0
    %133 = vmatpush1.msra.mxu0 0.0
    %134 = vmatprep.subr.mxu0 0.0
    %135 = vmatpush1.msra.mxu0 0.0
    %136 = vmatprep.subr.mxu0 0.0
    %137 = vmatpush1.msra.mxu0 0.0
    %138 = vmatprep.subr.mxu0 0.0
    %139 = vmatpush1.msra.mxu0 0.0
    %140 = vmatprep.subr.mxu0 0.0
    %141 = vmatpush1.msra.mxu0 0.0
    %142 = vmatprep.mubr.f32.mxu0 %v76
    %143 = vmatmul.mubr.f32.gmra.mrb[0].mxu0 %v41
    %v144 = vpop.f32.mrb[0].mxu0
    %v145 = vadd.f32 %v72, %v144
    %v146 = vpop.f32.mrb[0].mxu0
    %147 = vdwg.mxu0
    %148 = vst [vmem:[#allocation7] sm:$0xff] %v145
    // Predicated region
    $region22: #{tpu_custom_call.1} parent=1 // pred_check
      _
    $region23: #{tpu_custom_call.1} parent=1 // pred_check_branch
      %150 = sbr.rel (0) target = $region25
    $region24: #{tpu_custom_call.1} parent=1 // pred_region
      %s152 = ssub.s32 128, 128
      %153 = vsyncadd [#allocation4], %s152
      %s155 = sshll.u32 [#allocation7], 4
      %s156 = int_to_ptr.vmem [resolvable:$true] %s155
      %158 = dma.vmem_to_hbm [thread:$0]  %s156, 128, %s3, [#allocation4]
    $region25: #{tpu_custom_call.1} parent=1 // pred_fallthru
      _
    // Predicated region
    $region26: #{tpu_custom_call.1} parent=1 // pred_check
      _
    $region27: #{tpu_custom_call.1} parent=1 // pred_check_branch
      %160 = sbr.rel (0) target = $region29
    $region28: #{tpu_custom_call.1} parent=1 // pred_region
      %161 = dma.done [#allocation4], 128
    $region29: #{tpu_custom_call.1} parent=1 // pred_fallthru
      _
    %162 = vsyncpa [#allocation3], 1
    %163 = vsyncpa [#allocation6], 1
    %164 = vsyncpa [#allocation4], 1

</llo_original>
